<compile_context>
chip_gen: v7x
topology: tpu7x:2x2x1
jax: 0.10.0
libtpu: 0.0.40
codegen_flags: <defaults>
</compile_context>

<pallas_src>
import functools

import jax
import jax.numpy as jnp
from jax.experimental import pallas as pl
from jax.experimental.pallas import tpu as pltpu

_MULTI_DMA_MIN_BYTES = 4 * 1024 * 1024  # below this, one descriptor wins
_DEFAULT_MAX_SLICES = 8


def no_action(x: jax.Array) -> jax.Array:
    """Faithful translation of NoAction.forward: identity, zero cost."""
    return x


# ----------------------------------------------------------------------------
# Zero-copy Pallas path: output buffer aliases the input buffer, body is a
# no-op. When the caller donates `x` at the jit boundary this is 0 bytes of
# HBM traffic (pure dispatch overhead); without donation XLA inserts a single
# defensive copy and the result is still correct.
# ----------------------------------------------------------------------------
def _noop_kernel(x_hbm_ref, o_hbm_ref):
    # Output is aliased to the input (input_output_aliases={0: 0}); the buffer
    # already contains x, so there is nothing to do.
    pass


def no_action_pallas_aliased(x: jax.Array) -> jax.Array:
    return pl.pallas_call(
        _noop_kernel,
        out_shape=jax.ShapeDtypeStruct(x.shape, x.dtype),
        in_specs=[pl.BlockSpec(memory_space=pl.ANY)],
        out_specs=pl.BlockSpec(memory_space=pl.ANY),
        input_output_aliases={0: 0},
        cost_estimate=pl.CostEstimate(flops=0, transcendentals=0, bytes_accessed=0),
    )(x)


# ----------------------------------------------------------------------------
# Materialized-copy Pallas path: HBM->HBM DMA(s), zero VMEM usage.
# ----------------------------------------------------------------------------
def _single_dma_copy_kernel(x_hbm_ref, o_hbm_ref, copy_sem):
    # One whole-array HBM->HBM DMA: no vld/vst work, no VMEM, no grid.
    cp = pltpu.make_async_copy(x_hbm_ref, o_hbm_ref, copy_sem)
    cp.start()
    cp.wait()


def _multi_dma_copy_kernel(x_hbm_ref, o_hbm_ref, copy_sems, *, slices):
    # Issue all slice DMAs back-to-back (concurrent, one semaphore each),
    # then wait on all of them. Keeps multiple HBM descriptors in flight.
    copies = []
    for k, (start, size) in enumerate(slices):
        cp = pltpu.make_async_copy(
            x_hbm_ref.at[pl.ds(start, size)],
            o_hbm_ref.at[pl.ds(start, size)],
            copy_sems.at[k],
        )
        cp.start()
        copies.append(cp)
    for cp in copies:
        cp.wait()


def no_action_pallas(x: jax.Array, *, num_slices: int | None = None) -> jax.Array:
    """Pallas-kernel version of NoAction.forward that materializes a copy."""
    nbytes = x.size * x.dtype.itemsize

    if num_slices is None:
        if x.ndim >= 1 and nbytes >= _MULTI_DMA_MIN_BYTES:
            num_slices = min(_DEFAULT_MAX_SLICES, x.shape[0])
        else:
            num_slices = 1
    lead = x.shape[0] if x.ndim >= 1 else 1
    num_slices = max(1, min(int(num_slices), lead))

    # True memory cost of the custom call (read + write) so XLA's scheduler
    # can overlap this copy with surrounding compute.
    cost = pl.CostEstimate(flops=0, transcendentals=0, bytes_accessed=2 * nbytes)

    if num_slices == 1:
        kernel = _single_dma_copy_kernel
        scratch_shapes = [pltpu.SemaphoreType.DMA(())]
    else:
        base, rem = divmod(lead, num_slices)
        slices, start = [], 0
        for k in range(num_slices):
            size = base + (1 if k < rem else 0)
            slices.append((start, size))
            start += size
        kernel = functools.partial(_multi_dma_copy_kernel, slices=tuple(slices))
        scratch_shapes = [pltpu.SemaphoreType.DMA((num_slices,))]

    # TODO(synk): for very large copies on v7x, additionally shard across the
    # 2 TensorCores with grid=(2,) + dimension_semantics=("parallel",).
    return pl.pallas_call(
        kernel,
        out_shape=jax.ShapeDtypeStruct(x.shape, x.dtype),
        in_specs=[pl.BlockSpec(memory_space=pl.ANY)],   # raw HBM ref, no auto-DMA
        out_specs=pl.BlockSpec(memory_space=pl.ANY),    # raw HBM ref, no auto-DMA
        scratch_shapes=scratch_shapes,
        cost_estimate=cost,
    )(x)


if __name__ == "__main__":
    key = jax.random.PRNGKey(0)
    x = jax.random.normal(key, (2, 4, 16, 16), dtype=jnp.float32)

    # 1) True identity path (the faithful translation of forward(x) -> x).
    assert no_action(x) is x

    # 2) Materialized Pallas copy: tiny input -> single HBM->HBM DMA.
    y = no_action_pallas(x)
    jax.block_until_ready(y)
    assert y.shape == x.shape and y.dtype == x.dtype
    assert bool(jnp.all(y == x))

    # 3) Exercise the concurrent multi-slice DMA path explicitly.
    xb = jax.random.normal(jax.random.PRNGKey(1), (256, 512), dtype=jnp.float32)
    yb = no_action_pallas(xb, num_slices=4)
    jax.block_until_ready(yb)
    assert yb.shape == xb.shape and yb.dtype == xb.dtype
    assert bool(jnp.all(yb == xb))

    # 4) Zero-copy aliased Pallas path (correct with or without donation).
    ya = no_action_pallas_aliased(x)
    jax.block_until_ready(ya)
    assert ya.shape == x.shape and ya.dtype == x.dtype
    assert bool(jnp.all(ya == x))

    print("KERNEL_OK")
</pallas_src>

<mosaic_0001>
module attributes {stable_mosaic.version = 11 : i64} {
  func.func @_single_dma_copy_kernel(%arg0: memref<2x4x16x16xf32, #tpu.memory_space<any>>, %arg1: memref<2x4x16x16xf32, #tpu.memory_space<any>>, %arg2: memref<!tpu.dma_semaphore, #tpu.memory_space<semaphore_mem>>) attributes {dimension_semantics = [], scalar_prefetch = 0 : i64, scratch_operands = 1 : i64, tpu.core_type = #tpu.core_type<tc>} {
    tpu.enqueue_dma source(%arg0 : memref<2x4x16x16xf32, #tpu.memory_space<any>>) target(%arg1 : memref<2x4x16x16xf32, #tpu.memory_space<any>>) target_semaphore(%arg2 : memref<!tpu.dma_semaphore, #tpu.memory_space<semaphore_mem>>)
    tpu.wait_dma2 semaphore(%arg2 : memref<!tpu.dma_semaphore, #tpu.memory_space<semaphore_mem>>) src(%arg0 : memref<2x4x16x16xf32, #tpu.memory_space<any>>) dst(%arg1 : memref<2x4x16x16xf32, #tpu.memory_space<any>>)
    return
  }
}

</mosaic_0001>

<llo_original>
// kernel: tpu_custom_call.1
$region0: #{tpu_custom_call.1}
  #allocation0 [shape = 'u32[]', space=smem, size = 0x4, offset = 0x4, fixed_abs, tag = 'smem constant byte address 0x4 - core index']
  #allocation1 [shape = 'u32[144,128]{1,0:T(1,128)}', space=vmem, size = 0x12000, scoped, tag = 'internal scratch']
  #allocation2 [shape = 's32[1]{0}', space=sflag, size = 0x4, scoped, tag = 'scratch operand']
  #allocation3 [shape = 's32[]', space=sflag, size = 0x4, offset = 0, fixed_abs, tag = 'sflag constant byte address 0x0 - dummy sync flag']
  #allocation4 [shape = 'u32[0]{0}', space=smem, size = 0, offset = 0, fixed_abs, tag = 'smem constant byte address 0x0 - null']
  %s0 = inlined_call_operand.hbm [shape: f32[2,4,16,16], index: 0, kind: input, shape index: {}]
  %s1 = inlined_call_operand.hbm [shape: f32[2,4,16,16], index: 1, kind: output, shape index: {}]
  %s2 = sld [smem:[#allocation0]]
  $region2: #{tpu_custom_call.1} parent=0
    _
  %s4 = ssub.s32 1, %s2
  %s5 = scalar_select 0, %s4, %s2
  %s7 = sshll.u32 1, 14
  %s8 = sxor.u32 4294967295, %s7
  %s11 = sshll.u32 3, 24
  %s12 = sxor.u32 4294967295, %s11
  %s13 = sand.u32 0, %s12
  %s15 = sor.u32 %s13, 0
  %18 = dma.general %s0, 2048, %s1, [#allocation2], [#allocation3], [#allocation4], %s15, 0
  %s19 = smul.u32 2, 4
  %s20 = smul.u32 %s19, 16
  %s21 = smul.u32 %s20, 1
  %s22 = sshll.u32 %s21, 4
  %23 = dma.done [#allocation2], %s22
  %24 = vsyncmov [#allocation2]
  %s25 = vpop.sfrf %24
  %p26 = scmp.eq.s32.totalorder %s25, 0
  %p27 = pneg %p26
  %29 = shalt.err (%p27)

</llo_original>
